<compile_context>
chip_gen: v5e
topology: v5e:2x2
jax: 0.10.0
libtpu: 0.0.40
codegen_flags: <defaults>
</compile_context>

<pallas_src>
import functools

import jax
import jax.numpy as jnp
from jax.experimental import pallas as pl
from jax.experimental.pallas import tpu as pltpu


def _round_up(x, m):
    return (x + m - 1) // m * m


def _min_fill_scalar(dtype):
    """Identity element for max() as a *Python* scalar.

    Must be a Python scalar (not a jnp array): Pallas kernels may not close
    over traced/array constants.
    """
    if jnp.issubdtype(dtype, jnp.floating):
        return float("-inf")
    if jnp.issubdtype(dtype, jnp.unsignedinteger):
        return 0
    return int(jnp.iinfo(dtype).min)


def _single_block_kernel(x_ref, o_ref):
    # Whole (M, L) array resident in VMEM; one reduce, lane-dense (1, M) output.
    o_ref[...] = jnp.max(x_ref[...], axis=-1)[None, :]


def _tiled_rowmax_kernel(x_ref, o_ref, *, tl, l_total, grid_l, fill):
    """x_ref: (tm, tl) input block; o_ref: (1, 1, tm) lane-dense running max."""
    multi_l = grid_l > 1
    k = pl.program_id(1)

    def reduce_and_store(x):
        bm = jnp.max(x, axis=-1)[None, None, :]      # (1, 1, tm): lane-dense
        if not multi_l:
            o_ref[...] = bm
            return

        @pl.when(k == 0)
        def _init():
            o_ref[...] = bm

        @pl.when(k > 0)
        def _acc():
            o_ref[...] = jnp.maximum(o_ref[...], bm)

    if l_total % tl == 0:
        reduce_and_store(x_ref[...])
    else:
        # Ragged L: only the last k block needs masking; steady-state blocks
        # keep the single cross-lane reduce (no iota/compare/select).
        @pl.when(k < grid_l - 1)
        def _body():
            reduce_and_store(x_ref[...])

        @pl.when(k == grid_l - 1)
        def _tail():
            pos = (grid_l - 1) * tl + jax.lax.broadcasted_iota(
                jnp.int32, x_ref.shape, 1
            )
            reduce_and_store(jnp.where(pos < l_total, x_ref[...], fill))


def global_max_pool1d(x, *, block_bytes=8 * 1024 * 1024):
    """(N, C, L) -> (N, C, 1): exact F.max_pool1d(x, kernel_size=L) semantics."""
    N, C, L = x.shape
    M = N * C
    dtype = x.dtype
    itemsize = jnp.dtype(dtype).itemsize
    # dtype-aware sublane packing: 8 rows f32, 16 rows bf16, 32 rows int8/fp8
    sub = 8 * max(1, 4 // itemsize)
    x2d = x.reshape(M, L)  # free view: row-major contiguous

    total_bytes = M * L * itemsize
    tiny_bytes = min(4 << 20, block_bytes)

    # --- tiny path: one full-array VMEM block, no grid -----------------------
    if total_bytes <= tiny_bytes:
        out = pl.pallas_call(
            _single_block_kernel,
            out_shape=jax.ShapeDtypeStruct((1, M), dtype),
        )(x2d)
        return out.reshape(N, C, 1)

    # --- block sizing ---------------------------------------------------------
    block_elems = max(block_bytes // itemsize, sub * 128)

    if M < 2 * sub:
        tm = M  # full row extent: always a legal block dim
    else:
        row_cap = max(sub, (block_elems // L) // sub * sub)
        # >= 2 row blocks when rows would otherwise fit in one block, so both
        # v7x TensorCores get work (one extra ~0.35us step on 1-TC chips).
        tm = max(sub, min(row_cap, _round_up(pl.cdiv(M, 2), sub)))

    if tm * L <= block_elems:
        tl = L  # whole length fits: no reduction grid axis needed
    else:
        tl = (block_elems // tm) // 128 * 128
        # keep per-row DMA segments reasonably long even at the minimum tm
        tl = max(tl, min(2048, _round_up(L, 128)))
        if tl >= L:
            tl = L

    grid_m = pl.cdiv(M, tm)
    grid_l = pl.cdiv(L, tl)

    kernel = functools.partial(
        _tiled_rowmax_kernel,
        tl=tl,
        l_total=L,
        grid_l=grid_l,
        fill=_min_fill_scalar(dtype),
    )

    # double-buffered input + tiny output + headroom; capped under v7x's 64 MiB
    vmem_need = 2 * tm * tl * itemsize + 2 * _round_up(tm, 128) * itemsize + (2 << 20)
    vmem_limit = int(min(max(32 << 20, vmem_need), 64 << 20))

    out = pl.pallas_call(
        kernel,
        out_shape=jax.ShapeDtypeStruct((grid_m, 1, tm), dtype),
        grid_spec=pltpu.PrefetchScalarGridSpec(
            num_scalar_prefetch=0,
            grid=(grid_m, grid_l),
            in_specs=[pl.BlockSpec((tm, tl), lambda i, k: (i, k))],
            # Lane-dense (1, 1, tm) row per row-block: unmasked stores instead
            # of 1-lane-per-vreg (tm, 1) columns.
            out_specs=pl.BlockSpec((1, 1, tm), lambda i, k: (i, 0, 0)),
        ),
        compiler_params=pltpu.CompilerParams(
            # TODO(synk): on v7x, pltpu.CORE_PARALLEL on the row axis (or a
            # core_map split) would stream on both TensorCores; kept "parallel"
            # here for portability across v5e/v6e/interpret.
            dimension_semantics=("parallel", "arbitrary"),
            vmem_limit_bytes=vmem_limit,
        ),
    )(x2d)

    # (grid_m, 1, tm) flattens to rows in order; drop ragged-M padding rows.
    return out.reshape(grid_m * tm)[:M].reshape(N, C, 1)


def _ref(x):
    return jnp.max(x, axis=2, keepdims=True)


if __name__ == "__main__":
    key = jax.random.PRNGKey(0)
    k1, k2, k3, k4 = jax.random.split(key, 4)

    # 1) Small shape consistent with the module's forward (tiny single-block path).
    x_small = jax.random.normal(k1, (2, 4, 16), dtype=jnp.float32)
    out_small = jax.block_until_ready(global_max_pool1d(x_small))
    assert out_small.shape == (2, 4, 1)
    assert jnp.allclose(out_small, _ref(x_small)), "small-path mismatch"

    # 2) Row-batched grid path (2 lane-dense row blocks, single L block).
    x_med = jax.random.normal(k2, (4, 64, 512), dtype=jnp.float32)
    out_med = jax.block_until_ready(
        global_max_pool1d(x_med, block_bytes=256 * 1024)
    )
    assert out_med.shape == (4, 64, 1)
    assert jnp.allclose(out_med, _ref(x_med)), "row-tiled-path mismatch"

    # 3) L-tiled reduction path (running max + tail masking on the last block).
    x_long = jax.random.normal(k3, (2, 8, 5000), dtype=jnp.float32)
    out_long = jax.block_until_ready(
        global_max_pool1d(x_long, block_bytes=64 * 1024)
    )
    assert out_long.shape == (2, 8, 1)
    assert jnp.allclose(out_long, _ref(x_long)), "L-tiled-path mismatch"

    # 4) Ragged-M path (M not a multiple of tm -> padded lane-dense slab, sliced).
    x_rag = jax.random.normal(k4, (3, 20, 256), dtype=jnp.float32)
    out_rag = jax.block_until_ready(
        global_max_pool1d(x_rag, block_bytes=32 * 1024)
    )
    assert out_rag.shape == (3, 20, 1)
    assert jnp.allclose(out_rag, _ref(x_rag)), "ragged-M-path mismatch"

    print("KERNEL_OK")
</pallas_src>

<mosaic_0001>
module attributes {stable_mosaic.version = 11 : i64} {
  func.func @_single_block_kernel(%arg0: memref<8x16xf32, #tpu.memory_space<vmem>>, %arg1: memref<1x8xf32, #tpu.memory_space<vmem>>) attributes {dimension_semantics = [], scalar_prefetch = 0 : i64, scratch_operands = 0 : i64, tpu.core_type = #tpu.core_type<tc>} {
    %c0 = arith.constant 0 : index
    %c0_0 = arith.constant 0 : index
    %0 = vector.load %arg0[%c0, %c0_0] : memref<8x16xf32, #tpu.memory_space<vmem>>, vector<8x16xf32>
    %cst = arith.constant dense<0xFF800000> : vector<8xf32>
    %1 = vector.multi_reduction <maximumf>, %0, %cst [1] : vector<8x16xf32> to vector<8xf32>
    %2 = vector.shape_cast %1 : vector<8xf32> to vector<1x8xf32>
    %c0_1 = arith.constant 0 : index
    %c0_2 = arith.constant 0 : index
    %3 = vector.load %arg1[%c0_1, %c0_2] : memref<1x8xf32, #tpu.memory_space<vmem>>, vector<1x8xf32>
    tpu.vector_store %arg1[%c0_1, %c0_2], %2 {strides = array<i32>} : memref<1x8xf32, #tpu.memory_space<vmem>>, vector<1x8xf32>,
    return
  }
}

</mosaic_0001>

<llo_original>
// kernel: tpu_custom_call.1
$region0: #{tpu_custom_call.1}
  #allocation0 [shape = 'u32[]', space=smem, size = 0x4, offset = 0x4, fixed_abs, tag = 'smem constant byte address 0x4 - core index']
  #allocation1 [shape = 'u32[72,128]{1,0:T(1,128)}', space=vmem, size = 0x9000, scoped, tag = 'internal scratch']
  %s0 = inlined_call_operand.hbm [shape: f32[8,16], index: 0, kind: input, shape index: {}]
  %s1 = inlined_call_operand.hbm [shape: f32[1,8], index: 1, kind: output, shape index: {}]
  %s2 = sld [smem:[#allocation0]]
  $region18: #{tpu_custom_call.1} parent=0
    _
  %s4 = ssub.s32 1, %s2
  %s5 = scalar_select 0, %s4, %s2
  $region1: #{tpu_custom_call.1} parent=0
    #allocation2 [shape = 'u8[4096]{0}', space=vmem, size = 0x1000, scoped, tag = 'input window, operand 0, single buffered']
    #allocation3 [shape = 's32[1]{0}', space=sflag, size = 0x4, scoped, tag = 'scoped memory for tpu_custom_call.1']
    #allocation4 [shape = 's32[1]{0}', space=sflag, size = 0x4, scoped, tag = 'scoped memory for tpu_custom_call.1']
    #allocation5 [shape = 'u8[512]{0}', space=vmem, size = 0x400, scoped, tag = 'output window, operand 0, single buffered']
    %6 = vsyncpa [#allocation3], 0
    %7 = vsyncpa [#allocation4], 0
    // Predicated region
    $region2: #{tpu_custom_call.1} parent=1 // pred_check
      _
    $region3: #{tpu_custom_call.1} parent=1 // pred_check_branch
      %9 = sbr.rel (0) target = $region5
    $region4: #{tpu_custom_call.1} parent=1 // pred_region
      %11 = vsyncadd [#allocation3], 0
      %s13 = sshll.u32 %s0, 4
      %s14 = int_to_ptr.hbm [resolvable:$true] %s13
      %s15 = sshll.u32 [#allocation2], 4
      %s16 = int_to_ptr.vmem [resolvable:$true] %s15
      %18 = dma.hbm_to_vmem [thread:$0]  %s14, 128, %s16, [#allocation3]
    $region5: #{tpu_custom_call.1} parent=1 // pred_fallthru
      _
    // Predicated region
    $region6: #{tpu_custom_call.1} parent=1 // pred_check
      _
    $region7: #{tpu_custom_call.1} parent=1 // pred_check_branch
      %20 = sbr.rel (0) target = $region9
    $region8: #{tpu_custom_call.1} parent=1 // pred_region
      %22 = dma.done [#allocation3], 128
    $region9: #{tpu_custom_call.1} parent=1 // pred_fallthru
      _
    %v23 = vld [vmem:[#allocation2] sm:$0xff]
    %vm24 = vcmask 130048
    %v25 = vsel %vm24, %v23, -inf
    %26 = vmax.xlane.f32.xlu0 %v25
    %v27 = vpop.xlane.xlu0 %26
    %v29 = vlaneseq
    %v30 = vand.u32 %v29, 127
    %v31 = vperm.slane %v27, %v30
    %vm33 = vcmask 57344
    %34 = vst.msk [vmem:[#allocation5] sm:$0x1] %vm33, %v31
    // Predicated region
    $region10: #{tpu_custom_call.1} parent=1 // pred_check
      _
    $region11: #{tpu_custom_call.1} parent=1 // pred_check_branch
      %36 = sbr.rel (0) target = $region13
    $region12: #{tpu_custom_call.1} parent=1 // pred_region
      %38 = vsyncadd [#allocation4], 0
      %s40 = sshll.u32 [#allocation5], 4
      %s41 = int_to_ptr.vmem [resolvable:$true] %s40
      %s42 = sshll.u32 %s1, 4
      %s43 = int_to_ptr.hbm [resolvable:$true] %s42
      %45 = dma.vmem_to_hbm [thread:$0]  %s41, 16, %s43, [#allocation4]
    $region13: #{tpu_custom_call.1} parent=1 // pred_fallthru
      _
    // Predicated region
    $region14: #{tpu_custom_call.1} parent=1 // pred_check
      _
    $region15: #{tpu_custom_call.1} parent=1 // pred_check_branch
      %47 = sbr.rel (0) target = $region17
    $region16: #{tpu_custom_call.1} parent=1 // pred_region
      %49 = dma.done [#allocation4], 16
    $region17: #{tpu_custom_call.1} parent=1 // pred_fallthru
      _
    %50 = vsyncpa [#allocation3], 1
    %51 = vsyncpa [#allocation4], 1

</llo_original>
